<compile_context>
chip_gen: v7x
topology: tpu7x:2x2x1
jax: 0.10.0
libtpu: 0.0.40
codegen_flags: <defaults>
</compile_context>

<pallas_src>
import functools

import jax
import jax.numpy as jnp
from jax.experimental import pallas as pl
from jax.experimental.pallas import tpu as pltpu


def _vmem_budget_bytes():
    """Generation-aware VMEM budget for the kernel's working set."""
    phys = 64 * 1024 * 1024          # v7x per-core physical VMEM (smallest gen)
    try:
        info = pltpu.get_tpu_info()
        phys = int(getattr(info, "vmem_capacity_bytes", phys))
    except Exception:
        pass
    return min(phys // 4, 20 * 1024 * 1024)


def _pick_tile(c, itemsize, p, budget_bytes, cap=32768):
    """Largest power-of-two-multiple-of-128 lane tile fitting the VMEM budget."""
    # Per-lane bytes: double-buffered score + int8 label input blocks plus an
    # allowance for the in-kernel f32 temporaries (a few (C, tile) arrays live
    # at once).  The (C, 128) accumulators are negligible (not double-counted).
    per_lane = 2 * (c * itemsize + 1) + 8 * c * 4
    max_lanes = max(128, budget_bytes // per_lane)
    t = 128
    while 2 * t <= min(cap, max_lanes):
        t *= 2
    p_pad = 128
    while p_pad < p:
        p_pad *= 2
    return min(t, p_pad)


def _lane_fold(q):
    """(C, width) -> (C, 128) by tree-summing 128-lane groups.

    width is a power-of-two multiple of 128, so every slice is 128-lane
    aligned (no relayout) and all adds stay on the VALU (no XLU, no vst).
    """
    width = q.shape[1]
    while width > 128:
        half = width // 2
        q = q[:, :half] + q[:, half:]
        width = half
    return q


def _dice_partial_kernel(x_ref, t_ref, inter_ref, zsum_ref, ysum_ref, *,
                         n_pixels, tile, tiles_per_split, apply_softmax):
    split = pl.program_id(1)
    i = pl.program_id(2)

    @pl.when(i == 0)
    def _():
        inter_ref[...] = jnp.zeros_like(inter_ref)
        zsum_ref[...] = jnp.zeros_like(zsum_ref)
        ysum_ref[...] = jnp.zeros_like(ysum_ref)

    li = split * tiles_per_split + i          # unclamped linear tile index
    s = x_ref[0].astype(jnp.float32)          # (C, tile) scores, cast in-kernel
    t = t_ref[0].astype(jnp.int32)            # (1, tile) labels (int8 -> int32)
    c = s.shape[0]

    # Mask for the ragged tail of the flattened H*W axis and for dummy steps
    # past the last real tile (when the split axis over-covers n_tiles).
    pos = li * tile + jax.lax.broadcasted_iota(jnp.int32, (1, tile), 1)
    valid = pos < n_pixels                    # (1, tile)

    s = jnp.where(valid, s, 0.0)              # also sanitizes any OOB garbage
    if apply_softmax:
        m = jnp.max(s, axis=0, keepdims=True)
        e = jnp.exp(s - m)
        denom = jnp.sum(e, axis=0, keepdims=True)
        r = pl.reciprocal(denom, approx=True)          # EUP slot
        r = r * (2.0 - denom * r)                      # one Newton step
        s = jnp.where(valid, e * r, 0.0)

    cls = jax.lax.broadcasted_iota(jnp.int32, (c, tile), 0)
    is_cls = jnp.logical_and(t == cls, valid)          # one-hot(target) & valid
    onehot = jnp.where(is_cls, 1.0, 0.0)

    # Narrow (C, 128) VMEM-resident accumulators: lane-group fold per step,
    # tiny stores instead of full-width read-modify-writes.
    inter_ref[0, 0] += _lane_fold(jnp.where(is_cls, s, 0.0))   # sum score*target
    zsum_ref[0, 0] += _lane_fold(s * s)                        # sum score^2
    ysum_ref[0, 0] += _lane_fold(onehot)                       # sum target^2


def dice_loss(inputs, target, weight=None, softmax=False, *, max_tile=32768):
    """inputs: (N, C, H, W) float scores; target: (N, H, W) integer labels."""
    n, c, h, w = inputs.shape
    p = h * w

    x = inputs.reshape(n, c, p)                        # free reshape, native dtype
    label_dtype = jnp.int8 if c <= 127 else jnp.int32  # int8 labels when possible
    t = target.reshape(n, 1, p).astype(label_dtype)

    tile = _pick_tile(c, jnp.dtype(inputs.dtype).itemsize, p,
                      _vmem_budget_bytes(), cap=max_tile)
    n_tiles = -(-p // tile)

    # When a single sample would leave a second TensorCore (v7x) idle, split
    # the pixel-tile axis 2 ways; dummy trailing steps are masked in-kernel
    # and their block index is clamped so the DMA stays in bounds.
    splits = 2 if (n == 1 and n_tiles >= 2) else 1
    tps = -(-n_tiles // splits)

    kernel = functools.partial(
        _dice_partial_kernel, n_pixels=p, tile=tile, tiles_per_split=tps,
        apply_softmax=bool(softmax))

    def in_idx(b, s, i):
        return (b, 0, jnp.minimum(s * tps + i, n_tiles - 1))

    acc_shape = jax.ShapeDtypeStruct((n, splits, c, 128), jnp.float32)
    acc_spec = pl.BlockSpec((1, 1, c, 128), lambda b, s, i: (b, s, 0, 0))

    inter_p, z_p, y_p = pl.pallas_call(
        kernel,
        out_shape=(acc_shape, acc_shape, acc_shape),
        grid_spec=pltpu.PrefetchScalarGridSpec(
            num_scalar_prefetch=0,
            grid=(n, splits, tps),
            in_specs=[
                pl.BlockSpec((1, c, tile), in_idx),     # scores, native dtype
                pl.BlockSpec((1, 1, tile), in_idx),     # labels, int8/int32
            ],
            out_specs=[acc_spec, acc_spec, acc_spec],
        ),
        compiler_params=pltpu.CompilerParams(
            dimension_semantics=("parallel", "parallel", "arbitrary"),
            vmem_limit_bytes=32 * 1024 * 1024),
    )(x, t)

    # Tiny epilogue in plain JAX: lane/sample/split reduce, dice ratio, weights.
    inter = jnp.sum(inter_p, axis=(0, 1, 3))            # (C,)
    z = jnp.sum(z_p, axis=(0, 1, 3))
    y = jnp.sum(y_p, axis=(0, 1, 3))
    smooth = 1e-5
    dice = 1.0 - (2.0 * inter + smooth) / (z + y + smooth)
    if weight is None:
        w_vec = jnp.ones((c,), jnp.float32)
    else:
        w_vec = jnp.asarray(weight, jnp.float32).reshape(c)
    return jnp.sum(dice * w_vec) / c


def dice_loss_ref(inputs, target, weight=None, softmax=False):
    """Pure-JAX reference mirroring the PyTorch DiceLoss.forward semantics."""
    c = inputs.shape[1]
    if softmax:
        inputs = jax.nn.softmax(inputs.astype(jnp.float32), axis=1)
    onehot = (target[:, None, :, :] ==
              jnp.arange(c)[None, :, None, None]).astype(jnp.float32)
    if weight is None:
        weight = [1.0] * c
    smooth = 1e-5
    loss = 0.0
    for i in range(c):
        s = inputs[:, i].astype(jnp.float32)
        tt = onehot[:, i]
        inter = jnp.sum(s * tt)
        y = jnp.sum(tt * tt)
        zz = jnp.sum(s * s)
        dice = 1.0 - (2.0 * inter + smooth) / (zz + y + smooth)
        loss = loss + dice * weight[i]
    return loss / c


if __name__ == "__main__":
    key = jax.random.PRNGKey(0)
    k1, k2, k3, k4 = jax.random.split(key, 4)

    N, C, H, W = 2, 4, 16, 16
    inputs = jax.random.normal(k1, (N, C, H, W), dtype=jnp.float32)
    target = jax.random.randint(k2, (N, H, W), 0, C, dtype=jnp.int32)

    # default path (softmax=False), matching the PyTorch forward defaults
    loss = dice_loss(inputs, target)
    jax.block_until_ready(loss)
    ref = dice_loss_ref(inputs, target)
    assert jnp.allclose(loss, ref, rtol=1e-5, atol=1e-5), (loss, ref)

    # softmax=True path (approx reciprocal + Newton step -> slightly looser tol)
    loss_sm = dice_loss(inputs, target, softmax=True)
    jax.block_until_ready(loss_sm)
    ref_sm = dice_loss_ref(inputs, target, softmax=True)
    assert jnp.allclose(loss_sm, ref_sm, rtol=1e-4, atol=1e-4), (loss_sm, ref_sm)

    # per-class weights
    wgt = [0.1, 0.2, 0.3, 0.4]
    loss_w = dice_loss(inputs, target, weight=wgt, softmax=True)
    jax.block_until_ready(loss_w)
    ref_w = dice_loss_ref(inputs, target, weight=wgt, softmax=True)
    assert jnp.allclose(loss_w, ref_w, rtol=1e-4, atol=1e-4), (loss_w, ref_w)

    # native-dtype streaming: bf16 scores stay bf16 in HBM, f32 math in-kernel
    inputs_bf16 = inputs.astype(jnp.bfloat16)
    loss_bf = dice_loss(inputs_bf16, target)
    jax.block_until_ready(loss_bf)
    ref_bf = dice_loss_ref(inputs_bf16, target)
    assert jnp.allclose(loss_bf, ref_bf, rtol=1e-3, atol=1e-3), (loss_bf, ref_bf)

    # N=1, ragged H*W, multiple tiles + 2-way pixel split (v7x dual-core path)
    N2, H2, W2 = 1, 17, 31
    inp2 = jax.random.normal(k3, (N2, C, H2, W2), dtype=jnp.float32)
    tgt2 = jax.random.randint(k4, (N2, H2, W2), 0, C, dtype=jnp.int32)
    loss2 = dice_loss(inp2, tgt2, softmax=True, max_tile=128)
    jax.block_until_ready(loss2)
    ref2 = dice_loss_ref(inp2, tgt2, softmax=True)
    assert jnp.allclose(loss2, ref2, rtol=1e-4, atol=1e-4), (loss2, ref2)

    print("KERNEL_OK")
</pallas_src>

<mosaic_0001>
module attributes {stable_mosaic.version = 11 : i64} {
  func.func @_dice_partial_kernel(%arg0: i32, %arg1: i32, %arg2: i32, %arg3: memref<1x4x256xf32, #tpu.memory_space<vmem>>, %arg4: memref<1x1x256xi8, #tpu.memory_space<vmem>>, %arg5: memref<1x1x4x128xf32, #tpu.memory_space<vmem>>, %arg6: memref<1x1x4x128xf32, #tpu.memory_space<vmem>>, %arg7: memref<1x1x4x128xf32, #tpu.memory_space<vmem>>) attributes {dimension_semantics = [#tpu.dimension_semantics<parallel>, #tpu.dimension_semantics<parallel>, #tpu.dimension_semantics<arbitrary>], iteration_bounds = array<i64: 2, 1, 1>, scalar_prefetch = 0 : i64, scratch_operands = 0 : i64, tpu.core_type = #tpu.core_type<tc>, window_params = [{transform_indices = @transform_0, window_bounds = array<i64: 1, 4, 256>}, {transform_indices = @transform_1, window_bounds = array<i64: 1, 1, 256>}, {transform_indices = @transform_2, window_bounds = array<i64: 1, 1, 4, 128>}, {transform_indices = @transform_3, window_bounds = array<i64: 1, 1, 4, 128>}, {transform_indices = @transform_4, window_bounds = array<i64: 1, 1, 4, 128>}]} {
    %c0_i32 = arith.constant 0 : i32
    %0 = arith.cmpi eq, %arg2, %c0_i32 : i32
    %1 = arith.extui %0 : i1 to i32
    %c0_i32_0 = arith.constant 0 : i32
    %2 = arith.cmpi ne, %1, %c0_i32_0 : i32
    scf.if %2 {
      %cst_34 = arith.constant 0.000000e+00 : f32
      %58 = vector.broadcast %cst_34 : f32 to vector<1x1x4x128xf32>
      %c0_35 = arith.constant 0 : index
      %c0_36 = arith.constant 0 : index
      %c0_37 = arith.constant 0 : index
      %c0_38 = arith.constant 0 : index
      %59 = vector.load %arg5[%c0_35, %c0_36, %c0_37, %c0_38] : memref<1x1x4x128xf32, #tpu.memory_space<vmem>>, vector<1x1x4x128xf32>
      tpu.vector_store %arg5[%c0_35, %c0_36, %c0_37, %c0_38], %58 {strides = array<i32>} : memref<1x1x4x128xf32, #tpu.memory_space<vmem>>, vector<1x1x4x128xf32>,
      %cst_39 = arith.constant 0.000000e+00 : f32
      %60 = vector.broadcast %cst_39 : f32 to vector<1x1x4x128xf32>
      %c0_40 = arith.constant 0 : index
      %c0_41 = arith.constant 0 : index
      %c0_42 = arith.constant 0 : index
      %c0_43 = arith.constant 0 : index
      %61 = vector.load %arg6[%c0_40, %c0_41, %c0_42, %c0_43] : memref<1x1x4x128xf32, #tpu.memory_space<vmem>>, vector<1x1x4x128xf32>
      tpu.vector_store %arg6[%c0_40, %c0_41, %c0_42, %c0_43], %60 {strides = array<i32>} : memref<1x1x4x128xf32, #tpu.memory_space<vmem>>, vector<1x1x4x128xf32>,
      %cst_44 = arith.constant 0.000000e+00 : f32
      %62 = vector.broadcast %cst_44 : f32 to vector<1x1x4x128xf32>
      %c0_45 = arith.constant 0 : index
      %c0_46 = arith.constant 0 : index
      %c0_47 = arith.constant 0 : index
      %c0_48 = arith.constant 0 : index
      %63 = vector.load %arg7[%c0_45, %c0_46, %c0_47, %c0_48] : memref<1x1x4x128xf32, #tpu.memory_space<vmem>>, vector<1x1x4x128xf32>
      tpu.vector_store %arg7[%c0_45, %c0_46, %c0_47, %c0_48], %62 {strides = array<i32>} : memref<1x1x4x128xf32, #tpu.memory_space<vmem>>, vector<1x1x4x128xf32>,
    } else {
    }
    %c1_i32 = arith.constant 1 : i32
    %3 = arith.muli %arg1, %c1_i32 : i32
    %4 = arith.addi %3, %arg2 : i32
    %c0 = arith.constant 0 : index
    %c0_1 = arith.constant 0 : index
    %c0_2 = arith.constant 0 : index
    %5 = vector.load %arg3[%c0, %c0_1, %c0_2] : memref<1x4x256xf32, #tpu.memory_space<vmem>>, vector<1x4x256xf32>
    %6 = vector.shape_cast %5 : vector<1x4x256xf32> to vector<4x256xf32>
    %c0_3 = arith.constant 0 : index
    %c0_4 = arith.constant 0 : index
    %c0_5 = arith.constant 0 : index
    %7 = vector.load %arg4[%c0_3, %c0_4, %c0_5] : memref<1x1x256xi8, #tpu.memory_space<vmem>>, vector<1x1x256xi8>
    %8 = vector.shape_cast %7 : vector<1x1x256xi8> to vector<1x256xi8>
    %9 = arith.extsi %8 : vector<1x256xi8> to vector<1x256xi32>
    %c256_i32 = arith.constant 256 : i32
    %10 = arith.muli %4, %c256_i32 : i32
    %11 = tpu.iota {dimensions = array<i32: 1>} : vector<1x256xi32>
    %12 = vector.broadcast %10 : i32 to vector<1x256xi32>
    %13 = arith.addi %12, %11 : vector<1x256xi32>
    %c256_i32_6 = arith.constant 256 : i32
    %14 = vector.broadcast %c256_i32_6 : i32 to vector<1x256xi32>
    %15 = arith.cmpi slt, %13, %14 : vector<1x256xi32>
    %cst = arith.constant 0.000000e+00 : f32
    %16 = vector.shape_cast %15 : vector<1x256xi1> to vector<1x256xi1>
    %17 = vector.broadcast %16 : vector<1x256xi1> to vector<4x256xi1>
    %18 = vector.broadcast %cst : f32 to vector<4x256xf32>
    %19 = arith.select %17, %6, %18 : vector<4x256xi1>, vector<4x256xf32>
    %20 = tpu.iota {dimensions = array<i32: 0>} : vector<4x256xi32>
    %21 = vector.broadcast %9 : vector<1x256xi32> to vector<4x256xi32>
    %22 = arith.cmpi eq, %21, %20 : vector<4x256xi32>
    %23 = vector.broadcast %15 : vector<1x256xi1> to vector<4x256xi1>
    %24 = arith.andi %22, %23 : vector<4x256xi1>
    %cst_7 = arith.constant 1.000000e+00 : f32
    %cst_8 = arith.constant 0.000000e+00 : f32
    %25 = vector.broadcast %cst_7 : f32 to vector<4x256xf32>
    %26 = vector.broadcast %cst_8 : f32 to vector<4x256xf32>
    %27 = arith.select %24, %25, %26 : vector<4x256xi1>, vector<4x256xf32>
    %c0_9 = arith.constant 0 : index
    %c0_10 = arith.constant 0 : index
    %c0_11 = arith.constant 0 : index
    %c0_12 = arith.constant 0 : index
    %28 = vector.load %arg5[%c0_9, %c0_10, %c0_11, %c0_12] : memref<1x1x4x128xf32, #tpu.memory_space<vmem>>, vector<1x1x4x128xf32>
    %29 = vector.shape_cast %28 : vector<1x1x4x128xf32> to vector<4x128xf32>
    %cst_13 = arith.constant 0.000000e+00 : f32
    %30 = vector.broadcast %cst_13 : f32 to vector<4x256xf32>
    %31 = arith.select %24, %19, %30 : vector<4x256xi1>, vector<4x256xf32>
    %32 = vector.extract_strided_slice %31 {offsets = [0, 0], sizes = [4, 128], strides = [1, 1]} : vector<4x256xf32> to vector<4x128xf32>
    %33 = vector.extract_strided_slice %31 {offsets = [0, 128], sizes = [4, 128], strides = [1, 1]} : vector<4x256xf32> to vector<4x128xf32>
    %34 = arith.addf %32, %33 : vector<4x128xf32>
    %35 = arith.addf %29, %34 : vector<4x128xf32>
    %c0_14 = arith.constant 0 : index
    %c0_15 = arith.constant 0 : index
    %c0_16 = arith.constant 0 : index
    %c0_17 = arith.constant 0 : index
    %36 = vector.load %arg5[%c0_14, %c0_15, %c0_16, %c0_17] : memref<1x1x4x128xf32, #tpu.memory_space<vmem>>, vector<1x1x4x128xf32>
    %37 = vector.shape_cast %36 : vector<1x1x4x128xf32> to vector<4x128xf32>
    %38 = vector.shape_cast %35 : vector<4x128xf32> to vector<1x1x4x128xf32>
    tpu.vector_store %arg5[%c0_14, %c0_15, %c0_16, %c0_17], %38 {strides = array<i32>} : memref<1x1x4x128xf32, #tpu.memory_space<vmem>>, vector<1x1x4x128xf32>,
    %c0_18 = arith.constant 0 : index
    %c0_19 = arith.constant 0 : index
    %c0_20 = arith.constant 0 : index
    %c0_21 = arith.constant 0 : index
    %39 = vector.load %arg6[%c0_18, %c0_19, %c0_20, %c0_21] : memref<1x1x4x128xf32, #tpu.memory_space<vmem>>, vector<1x1x4x128xf32>
    %40 = vector.shape_cast %39 : vector<1x1x4x128xf32> to vector<4x128xf32>
    %41 = arith.mulf %19, %19 : vector<4x256xf32>
    %42 = vector.extract_strided_slice %41 {offsets = [0, 0], sizes = [4, 128], strides = [1, 1]} : vector<4x256xf32> to vector<4x128xf32>
    %43 = vector.extract_strided_slice %41 {offsets = [0, 128], sizes = [4, 128], strides = [1, 1]} : vector<4x256xf32> to vector<4x128xf32>
    %44 = arith.addf %42, %43 : vector<4x128xf32>
    %45 = arith.addf %40, %44 : vector<4x128xf32>
    %c0_22 = arith.constant 0 : index
    %c0_23 = arith.constant 0 : index
    %c0_24 = arith.constant 0 : index
    %c0_25 = arith.constant 0 : index
    %46 = vector.load %arg6[%c0_22, %c0_23, %c0_24, %c0_25] : memref<1x1x4x128xf32, #tpu.memory_space<vmem>>, vector<1x1x4x128xf32>
    %47 = vector.shape_cast %46 : vector<1x1x4x128xf32> to vector<4x128xf32>
    %48 = vector.shape_cast %45 : vector<4x128xf32> to vector<1x1x4x128xf32>
    tpu.vector_store %arg6[%c0_22, %c0_23, %c0_24, %c0_25], %48 {strides = array<i32>} : memref<1x1x4x128xf32, #tpu.memory_space<vmem>>, vector<1x1x4x128xf32>,
    %c0_26 = arith.constant 0 : index
    %c0_27 = arith.constant 0 : index
    %c0_28 = arith.constant 0 : index
    %c0_29 = arith.constant 0 : index
    %49 = vector.load %arg7[%c0_26, %c0_27, %c0_28, %c0_29] : memref<1x1x4x128xf32, #tpu.memory_space<vmem>>, vector<1x1x4x128xf32>
    %50 = vector.shape_cast %49 : vector<1x1x4x128xf32> to vector<4x128xf32>
    %51 = vector.extract_strided_slice %27 {offsets = [0, 0], sizes = [4, 128], strides = [1, 1]} : vector<4x256xf32> to vector<4x128xf32>
    %52 = vector.extract_strided_slice %27 {offsets = [0, 128], sizes = [4, 128], strides = [1, 1]} : vector<4x256xf32> to vector<4x128xf32>
    %53 = arith.addf %51, %52 : vector<4x128xf32>
    %54 = arith.addf %50, %53 : vector<4x128xf32>
    %c0_30 = arith.constant 0 : index
    %c0_31 = arith.constant 0 : index
    %c0_32 = arith.constant 0 : index
    %c0_33 = arith.constant 0 : index
    %55 = vector.load %arg7[%c0_30, %c0_31, %c0_32, %c0_33] : memref<1x1x4x128xf32, #tpu.memory_space<vmem>>, vector<1x1x4x128xf32>
    %56 = vector.shape_cast %55 : vector<1x1x4x128xf32> to vector<4x128xf32>
    %57 = vector.shape_cast %54 : vector<4x128xf32> to vector<1x1x4x128xf32>
    tpu.vector_store %arg7[%c0_30, %c0_31, %c0_32, %c0_33], %57 {strides = array<i32>} : memref<1x1x4x128xf32, #tpu.memory_space<vmem>>, vector<1x1x4x128xf32>,
    return
  }
  func.func @transform_0(%arg0: i32, %arg1: i32, %arg2: i32) -> (i32, i32, i32) {
    %c1_i32 = arith.constant 1 : i32
    %0 = arith.muli %arg1, %c1_i32 : i32
    %1 = arith.addi %0, %arg2 : i32
    %c0_i32 = arith.constant 0 : i32
    %2 = arith.minsi %1, %c0_i32 : i32
    %c0_i32_0 = arith.constant 0 : i32
    %c0_i32_1 = arith.constant 0 : i32
    return %arg0, %c0_i32_0, %2 : i32, i32, i32
  }
  func.func @transform_1(%arg0: i32, %arg1: i32, %arg2: i32) -> (i32, i32, i32) {
    %c1_i32 = arith.constant 1 : i32
    %0 = arith.muli %arg1, %c1_i32 : i32
    %1 = arith.addi %0, %arg2 : i32
    %c0_i32 = arith.constant 0 : i32
    %2 = arith.minsi %1, %c0_i32 : i32
    %c0_i32_0 = arith.constant 0 : i32
    %c0_i32_1 = arith.constant 0 : i32
    return %arg0, %c0_i32_0, %2 : i32, i32, i32
  }
  func.func @transform_2(%arg0: i32, %arg1: i32, %arg2: i32) -> (i32, i32, i32, i32) {
    %c0_i32 = arith.constant 0 : i32
    %c0_i32_0 = arith.constant 0 : i32
    %c0_i32_1 = arith.constant 0 : i32
    return %arg0, %arg1, %c0_i32, %c0_i32_0 : i32, i32, i32, i32
  }
  func.func @transform_3(%arg0: i32, %arg1: i32, %arg2: i32) -> (i32, i32, i32, i32) {
    %c0_i32 = arith.constant 0 : i32
    %c0_i32_0 = arith.constant 0 : i32
    %c0_i32_1 = arith.constant 0 : i32
    return %arg0, %arg1, %c0_i32, %c0_i32_0 : i32, i32, i32, i32
  }
  func.func @transform_4(%arg0: i32, %arg1: i32, %arg2: i32) -> (i32, i32, i32, i32) {
    %c0_i32 = arith.constant 0 : i32
    %c0_i32_0 = arith.constant 0 : i32
    %c0_i32_1 = arith.constant 0 : i32
    return %arg0, %arg1, %c0_i32, %c0_i32_0 : i32, i32, i32, i32
  }
}

</mosaic_0001>

<llo_original>
// kernel: tpu_custom_call.1
$region0: #{tpu_custom_call.1}
  #allocation0 [shape = 'u32[]', space=smem, size = 0x4, offset = 0x4, fixed_abs, tag = 'smem constant byte address 0x4 - core index']
  #allocation1 [shape = 'u32[144,128]{1,0:T(1,128)}', space=vmem, size = 0x12000, scoped, tag = 'internal scratch']
  %s0 = inlined_call_operand.hbm [shape: f32[2,4,256], index: 0, kind: input, shape index: {}]
  %s1 = inlined_call_operand.vmem [shape: s8[2,1,256], index: 1, kind: input, shape index: {}]
  %s2 = inlined_call_operand.hbm [shape: f32[2,1,4,128], index: 2, kind: output, shape index: {0}]
  %s3 = inlined_call_operand.hbm [shape: f32[2,1,4,128], index: 3, kind: output, shape index: {1}]
  %s4 = inlined_call_operand.hbm [shape: f32[2,1,4,128], index: 4, kind: output, shape index: {2}]
  %5 = xla_tuple %s2, %s3, %s4
  %s6 = sld [smem:[#allocation0]]
  $region65: #{tpu_custom_call.1} parent=0
    _
  %s8 = ssub.s32 1, %s6
  %s9 = scalar_select 0, %s8, %s6
  $region1: #{tpu_custom_call.1} parent=0
    #allocation2 [shape = 'u8[8192]{0}', space=vmem, size = 0x2000, scoped, tag = 'input window, operand 0']
    #allocation3 [shape = 's32[2]{0}', space=sflag, size = 0x8, scoped, tag = 'scoped memory for tpu_custom_call.1']
    #allocation4 [shape = 's32[2]{0}', space=sflag, size = 0x8, scoped, tag = 'scoped memory for tpu_custom_call.1']
    #allocation5 [shape = 'u8[4096]{0}', space=vmem, size = 0x1000, scoped, tag = 'output window, operand 0']
    #allocation6 [shape = 'u8[4096]{0}', space=vmem, size = 0x1000, scoped, tag = 'output window, operand 1']
    #allocation7 [shape = 's32[2]{0}', space=sflag, size = 0x8, scoped, tag = 'scoped memory for tpu_custom_call.1']
    #allocation8 [shape = 'u8[4096]{0}', space=vmem, size = 0x1000, scoped, tag = 'output window, operand 2']
    %10 = vsyncpa [#allocation3], 0
    %s11 = scalar_lea.sflag [#allocation3], 1
    %12 = vsyncpa %s11, 0
    %13 = vsyncpa [#allocation4], 0
    %s14 = scalar_lea.sflag [#allocation4], 1
    %15 = vsyncpa %s14, 0
    %16 = vsyncpa [#allocation7], 0
    %s17 = scalar_lea.sflag [#allocation7], 1
    %18 = vsyncpa %s17, 0
    loop: start=0, step=1, limit=4
    $region2: #{tpu_custom_call.1} parent=1 // loop_pre_header
      _
    $region3: #{tpu_custom_call.1} parent=1 // loop_header
      %s20 = sphi 0, %s24
      %p21 = scmp.ge.s32.totalorder %s20, 4
      %s27 = sphi 0, %s46
      %s28 = sphi 0, %s42
      %s29 = sphi 0, %s38
      %s30 = sphi 0, %s27
      %s31 = sphi 0, %s28
      %s32 = sphi 0, %s29
      %s33 = sphi 0, %s30
      %s34 = sphi 0, %s31
      %s35 = sphi 0, %s32
      %s57 = sphi 0, %s59
      %s60 = sphi 0, %s57
      %s61 = sphi 0, %s60
      %s77 = sphi 0, %s61
      %s91 = sphi 0, %s93
      %s94 = sphi 0, %s91
      %s95 = sphi 0, %s94
      %s111 = sphi 0, %s95
      %s119 = sphi 0, %s121
      %s122 = sphi 0, %s119
      %s123 = sphi 0, %s122
      %s139 = sphi 0, %s123
      %s147 = sphi 0, %s149
      %s150 = sphi 0, %s147
      %s151 = sphi 0, %s150
      %s167 = sphi 0, %s151
      %s175 = sphi 0, %s177
      %s178 = sphi 0, %s175
      %s179 = sphi 0, %s178
      %s195 = sphi 0, %s179
    $region4: #{tpu_custom_call.1} parent=1 // loop_header_branch
      %23 = sbr.rel (%p21) target = $region8
    $region5: #{tpu_custom_call.1} parent=1 // loop_body
      %s25 = ssub.s32 %s20, 1
      %s26 = ssub.s32 %s20, 2
      %s36 = sadd.s32 1, %s29
      %p37 = scmp.ge.s32.totalorder %s36, 1
      %s38 = scalar_select %p37, 0, %s36
      %s39 = sadd.s32 1, %s28
      %s40 = scalar_select %p37, %s39, %s28
      %p41 = scmp.ge.s32.totalorder %s40, 1
      %s42 = scalar_select %p41, 0, %s40
      %s43 = sadd.s32 1, %s27
      %s44 = scalar_select %p41, %s43, %s27
      %p45 = scmp.ge.s32.totalorder %s44, 2
      %s46 = scalar_select %p45, 0, %s44
      %s47 = sadd.s32 %s28, %s29
      %p48 = scmp.lt.s32.totalorder %s47, 0
      %s49 = scalar_select %p48, %s47, 0
      %s50 = sadd.s32 %s42, %s38
      %p51 = scmp.lt.s32.totalorder %s50, 0
      %s52 = scalar_select %p51, %s50, 0
      %s53 = ssub.s32 %s27, %s46
      %s54 = ssub.s32 %s49, %s52
      %s55 = sor.u32 %s53, %s54
      %p56 = scmp.eq.s32.totalorder %s55, 0
      %s58 = sadd.s32 %s57, 1
      %s59 = scalar_select %p56, %s57, %s58
      %p62 = pneg %p56
      %p63 = scmp.eq.s32.totalorder %s20, 1
      %p64 = por %p62, %p63
      %p65 = scmp.ne.s32.totalorder %s57, %s60
      %p66 = scmp.eq.s32.totalorder %s20, 0
      %p67 = por %p65, %p66
      %p68 = scmp.ne.s32.totalorder %s57, %s60
      %p69 = scmp.eq.s32.totalorder %s25, 1
      %p70 = por %p68, %p69
      %p71 = scmp.ne.s32.totalorder %s60, %s61
      %p72 = scmp.eq.s32.totalorder %s25, 0
      %p73 = por %p71, %p72
      %p74 = scmp.ne.s32.totalorder %s60, %s61
      %p75 = scmp.eq.s32.totalorder %s26, 1
      %p76 = por %p74, %p75
      %p78 = scmp.ne.s32.totalorder %s61, %s77
      %p79 = scmp.eq.s32.totalorder %s26, 0
      %p80 = por %p78, %p79
      %s81 = sadd.s32 %s28, %s29
      %p82 = scmp.lt.s32.totalorder %s81, 0
      %s83 = scalar_select %p82, %s81, 0
      %s84 = sadd.s32 %s42, %s38
      %p85 = scmp.lt.s32.totalorder %s84, 0
      %s86 = scalar_select %p85, %s84, 0
      %s87 = ssub.s32 %s27, %s46
      %s88 = ssub.s32 %s83, %s86
      %s89 = sor.u32 %s87, %s88
      %p90 = scmp.eq.s32.totalorder %s89, 0
      %s92 = sadd.s32 %s91, 1
      %s93 = scalar_select %p90, %s91, %s92
      %p96 = pneg %p90
      %p97 = scmp.eq.s32.totalorder %s20, 1
      %p98 = por %p96, %p97
      %p99 = scmp.ne.s32.totalorder %s91, %s94
      %p100 = scmp.eq.s32.totalorder %s20, 0
      %p101 = por %p99, %p100
      %p102 = scmp.ne.s32.totalorder %s91, %s94
      %p103 = scmp.eq.s32.totalorder %s25, 1
      %p104 = por %p102, %p103
      %p105 = scmp.ne.s32.totalorder %s94, %s95
      %p106 = scmp.eq.s32.totalorder %s25, 0
      %p107 = por %p105, %p106
      %p108 = scmp.ne.s32.totalorder %s94, %s95
      %p109 = scmp.eq.s32.totalorder %s26, 1
      %p110 = por %p108, %p109
      %p112 = scmp.ne.s32.totalorder %s95, %s111
      %p113 = scmp.eq.s32.totalorder %s26, 0
      %p114 = por %p112, %p113
      %s115 = ssub.s32 %s27, %s46
      %s116 = ssub.s32 %s28, %s42
      %s117 = sor.u32 %s115, %s116
      %p118 = scmp.eq.s32.totalorder %s117, 0
      %s120 = sadd.s32 %s119, 1
      %s121 = scalar_select %p118, %s119, %s120
      %p124 = pneg %p118
      %p125 = scmp.eq.s32.totalorder %s20, 1
      %p126 = por %p124, %p125
      %p127 = scmp.ne.s32.totalorder %s119, %s122
      %p128 = scmp.eq.s32.totalorder %s20, 0
      %p129 = por %p127, %p128
      %p130 = scmp.ne.s32.totalorder %s119, %s122
      %p131 = scmp.eq.s32.totalorder %s25, 1
      %p132 = por %p130, %p131
      %p133 = scmp.ne.s32.totalorder %s122, %s123
      %p134 = scmp.eq.s32.totalorder %s25, 0
      %p135 = por %p133, %p134
      %p136 = scmp.ne.s32.totalorder %s122, %s123
      %p137 = scmp.eq.s32.totalorder %s26, 1
      %p138 = por %p136, %p137
      %p140 = scmp.ne.s32.totalorder %s123, %s139
      %p141 = scmp.eq.s32.totalorder %s26, 0
      %p142 = por %p140, %p141
      %s143 = ssub.s32 %s27, %s46
      %s144 = ssub.s32 %s28, %s42
      %s145 = sor.u32 %s143, %s144
      %p146 = scmp.eq.s32.totalorder %s145, 0
      %s148 = sadd.s32 %s147, 1
      %s149 = scalar_select %p146, %s147, %s148
      %p152 = pneg %p146
      %p153 = scmp.eq.s32.totalorder %s20, 1
      %p154 = por %p152, %p153
      %p155 = scmp.ne.s32.totalorder %s147, %s150
      %p156 = scmp.eq.s32.totalorder %s20, 0
      %p157 = por %p155, %p156
      %p158 = scmp.ne.s32.totalorder %s147, %s150
      %p159 = scmp.eq.s32.totalorder %s25, 1
      %p160 = por %p158, %p159
      %p161 = scmp.ne.s32.totalorder %s150, %s151
      %p162 = scmp.eq.s32.totalorder %s25, 0
      %p163 = por %p161, %p162
      %p164 = scmp.ne.s32.totalorder %s150, %s151
      %p165 = scmp.eq.s32.totalorder %s26, 1
      %p166 = por %p164, %p165
      %p168 = scmp.ne.s32.totalorder %s151, %s167
      %p169 = scmp.eq.s32.totalorder %s26, 0
      %p170 = por %p168, %p169
      %s171 = ssub.s32 %s27, %s46
      %s172 = ssub.s32 %s28, %s42
      %s173 = sor.u32 %s171, %s172
      %p174 = scmp.eq.s32.totalorder %s173, 0
      %s176 = sadd.s32 %s175, 1
      %s177 = scalar_select %p174, %s175, %s176
      %p180 = pneg %p174
      %p181 = scmp.eq.s32.totalorder %s20, 1
      %p182 = por %p180, %p181
      %p183 = scmp.ne.s32.totalorder %s175, %s178
      %p184 = scmp.eq.s32.totalorder %s20, 0
      %p185 = por %p183, %p184
      %p186 = scmp.ne.s32.totalorder %s175, %s178
      %p187 = scmp.eq.s32.totalorder %s25, 1
      %p188 = por %p186, %p187
      %p189 = scmp.ne.s32.totalorder %s178, %s179
      %p190 = scmp.eq.s32.totalorder %s25, 0
      %p191 = por %p189, %p190
      %p192 = scmp.ne.s32.totalorder %s178, %s179
      %p193 = scmp.eq.s32.totalorder %s26, 1
      %p194 = por %p192, %p193
      %p196 = scmp.ne.s32.totalorder %s179, %s195
      %p197 = scmp.eq.s32.totalorder %s26, 0
      %p198 = por %p196, %p197
      %p199 = scmp.le.s32.totalorder 1, %s20
      %p200 = scmp.lt.s32.totalorder %s20, 3
      %p201 = pnand %p199, %p200
      %p202 = pneg %p201
      // Predicated region
      $region9: #{tpu_custom_call.1} parent=5 // pred_check
        _
      $region10: #{tpu_custom_call.1} parent=5 // pred_check_branch
        %204 = sbr.rel (%p201) target = $region12
      $region11: #{tpu_custom_call.1} parent=5 // pred_region
        %s205 = ssub.s32 %s20, 1
      $region12: #{tpu_custom_call.1} parent=5 // pred_fallthru
        _
      %p206 = scmp.lt.s32.totalorder %s20, 2
      // Predicated region
      $region13: #{tpu_custom_call.1} parent=5 // pred_check
        %p207 = pneg %p206
      $region14: #{tpu_custom_call.1} parent=5 // pred_check_branch
        %209 = sbr.rel (%p207) target = $region16
      $region15: #{tpu_custom_call.1} parent=5 // pred_region
        // Predicated region
        $region17: #{tpu_custom_call.1} parent=15 // pred_check
          %p210 = pneg %p67
        $region18: #{tpu_custom_call.1} parent=15 // pred_check_branch
          %212 = sbr.rel (%p210) target = $region20
        $region19: #{tpu_custom_call.1} parent=15 // pred_region
          %s213 = sand.u32 %s57, 1
          %s214 = scalar_lea.sflag [#allocation3], %s213
          %s215 = sand.u32 %s57, 1
          %s216 = smul.addr %s215, 8
          %s217 = scalar_lea.vmem [#allocation2], %s216
          %s218 = sadd.s32 %s28, %s29
          %p219 = scmp.lt.s32.totalorder %s218, 0
          %s220 = scalar_select %p219, %s218, 0
          %s221 = smul.u32 2, %s220
          %s223 = ssub.s32 128, 128
          %224 = vsyncadd %s214, %s223
          %s225 = smul.addr %s27, 2
          %s226 = sadd.s32 %s221, %s225
          %s227 = smul.addr %s226, 64
          %s228 = scalar_lea.hbm %s0, %s227
          %s230 = sshll.u32 %s217, 4
          %s231 = int_to_ptr.vmem [resolvable:$true] %s230
          %233 = dma.hbm_to_vmem [thread:$0]  %s228, 128, %s231, %s214
        $region20: #{tpu_custom_call.1} parent=15 // pred_fallthru
          _
        // Predicated region
        $region21: #{tpu_custom_call.1} parent=15 // pred_check
          %p234 = pneg %p101
        $region22: #{tpu_custom_call.1} parent=15 // pred_check_branch
          %236 = sbr.rel (%p234) target = $region24
        $region23: #{tpu_custom_call.1} parent=15 // pred_region
          %s237 = sadd.s32 %s28, %s29
          %p238 = scmp.lt.s32.totalorder %s237, 0
          %s239 = scalar_select %p238, %s237, 0
          %s240 = smul.u32 2, %s239
          %p241 = scmp.lt.s32.totalorder %s27, 1
          %s242 = scalar_select %p241, %s27, 1
          %p243 = scmp.lt.s32.totalorder %s240, 1
          %s244 = scalar_select %p243, %s240, 1
          %s245 = smul.addr %s242, 2
          %s246 = sadd.s32 %s244, %s245
          %s247 = scalar_lea.vmem %s1, %s246
          %s248 = sadd.s32 %s28, %s29
          %p249 = scmp.lt.s32.totalorder %s248, 0
          %s250 = scalar_select %p249, %s248, 0
          %s251 = smul.u32 2, %s250
        $region24: #{tpu_custom_call.1} parent=15 // pred_fallthru
          _
      $region16: #{tpu_custom_call.1} parent=5 // pred_fallthru
        _
      %p252 = scmp.le.s32.totalorder 1, %s20
      %p253 = scmp.lt.s32.totalorder %s20, 3
      %p254 = pnand %p252, %p253
      %p255 = pneg %p254
      // Predicated region
      $region25: #{tpu_custom_call.1} parent=5 // pred_check
        _
      $region26: #{tpu_custom_call.1} parent=5 // pred_check_branch
        %257 = sbr.rel (%p254) target = $region28
      $region27: #{tpu_custom_call.1} parent=5 // pred_region
        %s258 = ssub.s32 %s20, 1
        %s259 = sand.u32 %s60, 1
        %s260 = scalar_lea.sflag [#allocation3], %s259
        %s261 = sand.u32 %s60, 1
        %s262 = smul.addr %s261, 8
        %s263 = scalar_lea.vmem [#allocation2], %s262
        // Predicated region
        $region29: #{tpu_custom_call.1} parent=27 // pred_check
          %p264 = pneg %p73
        $region30: #{tpu_custom_call.1} parent=27 // pred_check_branch
          %266 = sbr.rel (%p264) target = $region32
        $region31: #{tpu_custom_call.1} parent=27 // pred_region
          %267 = dma.done %s260, 128
        $region32: #{tpu_custom_call.1} parent=27 // pred_fallthru
          _
        %s268 = sand.u32 %s60, 1
        %s269 = scalar_lea.sflag [#allocation3], %s268
        %s270 = sand.u32 %s60, 1
        %s271 = smul.addr %s270, 8
        %s272 = scalar_lea.vmem [#allocation2], %s271
        %p273 = pneg %p73
        %p274 = pneg %p70
        %s275 = sadd.s32 %s31, %s32
        %p276 = scmp.lt.s32.totalorder %s275, 0
        %s277 = scalar_select %p276, %s275, 0
        %s278 = smul.u32 2, %s277
        %p279 = scmp.lt.s32.totalorder %s30, 1
        %s280 = scalar_select %p279, %s30, 1
        %p281 = scmp.lt.s32.totalorder %s278, 1
        %s282 = scalar_select %p281, %s278, 1
        %s283 = smul.addr %s280, 2
        %s284 = sadd.s32 %s282, %s283
        %s285 = scalar_lea.vmem %s1, %s284
        %p286 = pneg %p107
        %p287 = pneg %p104
        %p288 = pneg %p135
        %p289 = pneg %p132
        %s290 = sand.u32 %s122, 1
        %s291 = scalar_lea.sflag [#allocation4], %s290
        %s292 = sand.u32 %s122, 1
        %s293 = smul.addr %s292, 4
        %s294 = scalar_lea.vmem [#allocation5], %s293
        %p295 = pneg %p163
        %p296 = pneg %p160
        %s297 = sand.u32 %s25, 1
        %s298 = scalar_lea.sflag [#allocation7], %s297
        %s299 = sand.u32 %s150, 1
        %s300 = smul.addr %s299, 4
        %s301 = scalar_lea.vmem [#allocation6], %s300
        %p302 = pneg %p191
        %p303 = pneg %p188
        %s304 = sand.u32 %s25, 1
        %s305 = scalar_lea.sflag [#allocation7], %s304
        %s306 = sand.u32 %s178, 1
        %s307 = smul.addr %s306, 4
        %s308 = scalar_lea.vmem [#allocation8], %s307
        %s309 = sadd.s32 %s31, %s32
        %p310 = scmp.lt.s32.totalorder %s309, 0
        %s311 = scalar_select %p310, %s309, 0
        %s312 = smul.u32 2, %s311
        %s313 = sadd.s32 %s31, %s32
        %p314 = scmp.lt.s32.totalorder %s313, 0
        %s315 = scalar_select %p314, %s313, 0
        %s316 = smul.u32 2, %s315
        %p317 = scmp.lt.s32.totalorder %s30, 1
        %s318 = scalar_select %p317, %s30, 1
        %p319 = scmp.lt.s32.totalorder %s316, 1
        %s320 = scalar_select %p319, %s316, 1
        %s321 = smul.addr %s318, 2
        %s322 = sadd.s32 %s320, %s321
        %s323 = scalar_lea.vmem %s1, %s322
        %s324 = sadd.s32 %s31, %s32
        %p325 = scmp.lt.s32.totalorder %s324, 0
        %s326 = scalar_select %p325, %s324, 0
        %s327 = smul.u32 2, %s326
        %p328 = scmp.eq.s32.totalorder %s32, 0
        // Predicated region
        $region33: #{tpu_custom_call.1} parent=27 // pred_check
          %p329 = pneg %p328
        $region34: #{tpu_custom_call.1} parent=27 // pred_check_branch
          %331 = sbr.rel (%p329) target = $region36
        $region35: #{tpu_custom_call.1} parent=27 // pred_region
          %332 = vst [vmem:[%s294] sm:$0xf] 0.0
          %333 = vst [vmem:[%s301] sm:$0xf] 0.0
          %334 = vst [vmem:[%s308] sm:$0xf] 0.0
        $region36: #{tpu_custom_call.1} parent=27 // pred_fallthru
          _
        %s335 = sadd.s32 %s31, %s32
        %v336 = vld [vmem:[%s263] sm:$0xff]
        %v337 = vld [vmem:[%s323] sm:$0x3]
        %v338 = vunpack.c.0.s8 %v337
        %s339 = smul.u32 %s335, 256
        %v340 = vlaneseq
        %v341 = vand.u32 %v340, 127
        %v342 = vadd.s32 %v341, 128
        %v343 = vstv %s339
        %v344 = vadd.s32 %v343, %v341
        %v345 = vadd.s32 %v343, %v342
        %vm346 = vcmp.lt.s32.totalorder %v344, 256
        %vm347 = vcmp.lt.s32.totalorder %v345, 256
        %v348 = vsel %vm346, 1, 0
        %v349 = vsel %vm347, 1, 0
        %vm350 = vcmp.eq.s32.totalorder %v348, 1
        %vm351 = vcmp.eq.s32.totalorder %v349, 1
        %v353 = vcombine.high %v336, %v336
        %v355 = vsel %vm350, %v336, 0.0
        %v356 = vsel %vm351, %v353, 0.0
        %v357 = vlaneseq
        %v358 = vshrl.u32 %v357, 7
        %v359 = vlaneseq
        %v360 = vshrl.u32 %v359, 7
        %v361 = vsub.s32 0, %v360
        %v362 = vrot.slane %v338, %v361
        %v363 = vlaneseq
        %v364 = vshrl.u32 %v363, 7
        %v365 = vsub.s32 4, %v364
        %v366 = vrot.slane %v338, %v365
        %v367 = vlaneseq
        %v368 = vshrl.u32 %v367, 7
        %v369 = vsub.s32 0, %v368
        %v370 = vrot.slane %v362, %v369
        %v371 = vlaneseq
        %v372 = vshrl.u32 %v371, 7
        %v373 = vsub.s32 0, %v372
        %v374 = vrot.slane %v366, %v373
        %vm375 = vcmp.eq.s32.totalorder %v370, %v358
        %vm376 = vcmp.eq.s32.totalorder %v374, %v358
        %vm377 = vmand %vm375, %vm350
        %vm378 = vmand %vm376, %vm351
        %v379 = vsel %vm377, 1.0, 0.0
        %v380 = vsel %vm378, 1.0, 0.0
        %v381 = vld [vmem:[%s294] sm:$0xf]
        %v382 = vsel %vm377, %v355, 0.0
        %v383 = vsel %vm378, %v356, 0.0
        %v384 = vadd.f32 %v382, %v383
        %v385 = vadd.f32 %v381, %v384
        %386 = vst [vmem:[%s294] sm:$0xf] %v385
        %v387 = vld [vmem:[%s301] sm:$0xf]
        %v388 = vmul.f32 %v355, %v355
        %v389 = vmul.f32 %v356, %v356
        %v390 = vadd.f32 %v388, %v389
        %v391 = vadd.f32 %v387, %v390
        %392 = vst [vmem:[%s301] sm:$0xf] %v391
        %v393 = vld [vmem:[%s308] sm:$0xf]
        %v394 = vadd.f32 %v379, %v380
        %v395 = vadd.f32 %v393, %v394
        %396 = vst [vmem:[%s308] sm:$0xf] %v395
        %s397 = sand.u32 %s122, 1
        %s398 = scalar_lea.sflag [#allocation4], %s397
        %s399 = sand.u32 %s122, 1
        %s400 = smul.addr %s399, 4
        %s401 = scalar_lea.vmem [#allocation5], %s400
        %s402 = sand.u32 %s25, 1
        %s403 = scalar_lea.sflag [#allocation7], %s402
        %s404 = sand.u32 %s150, 1
        %s405 = smul.addr %s404, 4
        %s406 = scalar_lea.vmem [#allocation6], %s405
        %s407 = sand.u32 %s25, 1
        %s408 = scalar_lea.sflag [#allocation7], %s407
        %s409 = sand.u32 %s178, 1
        %s410 = smul.addr %s409, 4
        %s411 = scalar_lea.vmem [#allocation8], %s410
        // Predicated region
        $region37: #{tpu_custom_call.1} parent=27 // pred_check
          %p412 = pneg %p132
        $region38: #{tpu_custom_call.1} parent=27 // pred_check_branch
          %414 = sbr.rel (%p412) target = $region40
        $region39: #{tpu_custom_call.1} parent=27 // pred_region
          %s416 = ssub.s32 64, 64
          %417 = vsyncadd %s398, %s416
          %s418 = sadd.s32 %s31, %s30
          %s419 = smul.addr %s418, 64
          %s420 = scalar_lea.hbm %s2, %s419
          %s422 = sshll.u32 %s401, 4
          %s423 = int_to_ptr.vmem [resolvable:$true] %s422
          %425 = dma.vmem_to_hbm [thread:$0]  %s423, 64, %s420, %s398
        $region40: #{tpu_custom_call.1} parent=27 // pred_fallthru
          _
        // Predicated region
        $region41: #{tpu_custom_call.1} parent=27 // pred_check
          %p426 = pneg %p160
        $region42: #{tpu_custom_call.1} parent=27 // pred_check_branch
          %428 = sbr.rel (%p426) target = $region44
        $region43: #{tpu_custom_call.1} parent=27 // pred_region
          %s430 = ssub.s32 64, 64
          %431 = vsyncadd %s403, %s430
          %s432 = sadd.s32 %s31, %s30
          %s433 = smul.addr %s432, 64
          %s434 = scalar_lea.hbm %s3, %s433
          %s436 = sshll.u32 %s406, 4
          %s437 = int_to_ptr.vmem [resolvable:$true] %s436
          %439 = dma.vmem_to_hbm [thread:$0]  %s437, 64, %s434, %s403
        $region44: #{tpu_custom_call.1} parent=27 // pred_fallthru
          _
        // Predicated region
        $region45: #{tpu_custom_call.1} parent=27 // pred_check
          %p440 = pneg %p188
        $region46: #{tpu_custom_call.1} parent=27 // pred_check_branch
          %442 = sbr.rel (%p440) target = $region48
        $region47: #{tpu_custom_call.1} parent=27 // pred_region
          %s444 = ssub.s32 64, 64
          %445 = vsyncadd %s408, %s444
          %s446 = sadd.s32 %s31, %s30
          %s447 = smul.addr %s446, 64
          %s448 = scalar_lea.hbm %s4, %s447
          %s450 = sshll.u32 %s411, 4
          %s451 = int_to_ptr.vmem [resolvable:$true] %s450
          %453 = dma.vmem_to_hbm [thread:$0]  %s451, 64, %s448, %s408
        $region48: #{tpu_custom_call.1} parent=27 // pred_fallthru
          _
      $region28: #{tpu_custom_call.1} parent=5 // pred_fallthru
        _
      %p454 = scmp.le.s32.totalorder 2, %s20
      // Predicated region
      $region49: #{tpu_custom_call.1} parent=5 // pred_check
        %p455 = pneg %p454
      $region50: #{tpu_custom_call.1} parent=5 // pred_check_branch
        %457 = sbr.rel (%p455) target = $region52
      $region51: #{tpu_custom_call.1} parent=5 // pred_region
        %s458 = ssub.s32 %s20, 2
        // Predicated region
        $region53: #{tpu_custom_call.1} parent=51 // pred_check
          %p459 = pneg %p138
        $region54: #{tpu_custom_call.1} parent=51 // pred_check_branch
          %461 = sbr.rel (%p459) target = $region56
        $region55: #{tpu_custom_call.1} parent=51 // pred_region
          %s462 = sand.u32 %s123, 1
          %s463 = scalar_lea.sflag [#allocation4], %s462
          %s464 = sand.u32 %s123, 1
          %s465 = smul.addr %s464, 4
          %s466 = scalar_lea.vmem [#allocation5], %s465
          %467 = dma.done %s463, 64
        $region56: #{tpu_custom_call.1} parent=51 // pred_fallthru
          _
        // Predicated region
        $region57: #{tpu_custom_call.1} parent=51 // pred_check
          %p468 = pneg %p166
        $region58: #{tpu_custom_call.1} parent=51 // pred_check_branch
          %470 = sbr.rel (%p468) target = $region60
        $region59: #{tpu_custom_call.1} parent=51 // pred_region
          %s471 = sand.u32 %s26, 1
          %s472 = scalar_lea.sflag [#allocation7], %s471
          %s473 = sand.u32 %s151, 1
          %s474 = smul.addr %s473, 4
          %s475 = scalar_lea.vmem [#allocation6], %s474
          %476 = dma.done %s472, 64
        $region60: #{tpu_custom_call.1} parent=51 // pred_fallthru
          _
        // Predicated region
        $region61: #{tpu_custom_call.1} parent=51 // pred_check
          %p477 = pneg %p194
        $region62: #{tpu_custom_call.1} parent=51 // pred_check_branch
          %479 = sbr.rel (%p477) target = $region64
        $region63: #{tpu_custom_call.1} parent=51 // pred_region
          %s480 = sand.u32 %s26, 1
          %s481 = scalar_lea.sflag [#allocation7], %s480
          %s482 = sand.u32 %s179, 1
          %s483 = smul.addr %s482, 4
          %s484 = scalar_lea.vmem [#allocation8], %s483
          %485 = dma.done %s481, 64
        $region64: #{tpu_custom_call.1} parent=51 // pred_fallthru
          _
      $region52: #{tpu_custom_call.1} parent=5 // pred_fallthru
        _
    $region6: #{tpu_custom_call.1} parent=1 // loop_footer
      %s24 = sadd.s32 1, %s20
    $region7: #{tpu_custom_call.1} parent=1 // loop_footer_branch
      %19 = sbr.rel target = $region3
    $region8: #{tpu_custom_call.1} parent=1 // loop_exit
      _
    %486 = vsyncpa [#allocation3], 1
    %s487 = scalar_lea.sflag [#allocation3], 1
    %488 = vsyncpa %s487, 1
    %489 = vsyncpa [#allocation4], 1
    %s490 = scalar_lea.sflag [#allocation4], 1
    %491 = vsyncpa %s490, 1
    %492 = vsyncpa [#allocation7], 1
    %s493 = scalar_lea.sflag [#allocation7], 1
    %494 = vsyncpa %s493, 1

</llo_original>
